<compile_context>
chip_gen: v7x
topology: tpu7x:2x2x1
jax: 0.10.0
libtpu: 0.0.40
codegen_flags: <defaults>
</compile_context>

<pallas_src>
import functools
import math

import jax
import jax.numpy as jnp
from jax import lax
from jax.experimental import pallas as pl
from jax.experimental.pallas import tpu as pltpu


# ----------------------------------------------------------------------------
# Pallas kernel: fused MLP (relu) -> lout -> in-kernel basis selection
# ----------------------------------------------------------------------------
def _make_decoder_kernel(layers_num):
    n_params = 2 * (layers_num + 1)  # (W, b) per hidden layer + lout

    def kernel(x_ref, t_ref, fbt_ref, *refs):
        params = refs[:n_params]
        wt_ref = refs[n_params]        # (D_out, block_n)  weights^T, f32
        dyn_ref = refs[n_params + 1]   # (1, block_n)      dynamic output, f32

        # ---- MLP hot path (MXU matmuls + VPU relu), batch on lanes ----
        h = x_ref[...]                                    # (bn, D_in) f32
        wt = None
        for i in range(layers_num + 1):
            W = params[2 * i][...]                        # (out, in) compute dtype
            b = params[2 * i + 1][...]                    # (out, 1)  f32
            if i == 0:
                # Contract D_in of BOTH operands -> (out, bn): folds the
                # feature transpose into the MXU (no wrapper transpose pass).
                a = lax.dot_general(W, h.astype(W.dtype),
                                    (((1,), (1,)), ((), ())),
                                    preferred_element_type=jnp.float32) + b
            else:
                a = jnp.dot(W, h, preferred_element_type=jnp.float32) + b
            if i < layers_num:
                h = jnp.maximum(a, 0.0).astype(W.dtype)   # hidden relu
            else:
                wt = a                                    # (D_out, bn) f32 acc

        wt_ref[...] = wt                                  # lane-dense store

        # ---- dynamic output: signals = full_basis^T @ wt, select row t[i] ----
        fbt = fbt_ref[...]                                # (T, D_out) f32
        t_num = fbt.shape[0]
        bn = wt.shape[1]
        s_all = jnp.dot(fbt, wt, preferred_element_type=jnp.float32)  # (T, bn)
        t_row = jnp.clip(t_ref[...], 0, t_num - 1)        # (1, bn) int32
        sel = lax.broadcasted_iota(jnp.int32, (t_num, bn), 0) == t_row
        dyn_ref[...] = jnp.sum(jnp.where(sel, s_all, 0.0),
                               axis=0, keepdims=True)     # (1, bn) lane-dense

    return kernel


# ----------------------------------------------------------------------------
# Tile selection: fewest lane-multiple tiles under `cap`, >=2 steps when
# possible (v7x megacore); pad waste bounded by ~128 * num_steps rows.
# ----------------------------------------------------------------------------
def _choose_block_n(n, cap=4096, min_steps=2):
    lanes = pl.cdiv(n, 128)                    # 128-row groups
    k = pl.cdiv(lanes * 128, cap)              # min steps to respect cap
    if lanes >= min_steps:
        k = max(k, min_steps)                  # keep both v7x TCs busy
    return pl.cdiv(lanes, k) * 128


# ----------------------------------------------------------------------------
# Wrapper
# ----------------------------------------------------------------------------
@functools.partial(jax.jit,
                   static_argnames=("layers_num", "block_n", "compute_dtype"))
def decoder_forward(feature, t, params_flat, full_basis, *, layers_num,
                    block_n=None, compute_dtype=jnp.bfloat16):
    """feature: (N, 1, D_in) f32, t: (N,) int (clamped to [0, t_num-1]).
    params_flat: [W0 (H,D_in), b0 (H,1), ..., Wout (D_out,H), bout (D_out,1)]
                 (PyTorch nn.Linear native (out, in) layout).
    full_basis: (D_out, T) f32.
    Returns (static_output (N,), dynamic_output (N,), weights (N, D_out))."""
    N = feature.shape[0]
    D_in = feature.shape[-1]
    D_out, T = full_basis.shape

    if block_n is None:
        block_n = _choose_block_n(N, cap=4096)   # sweepable cap (2048-8192)
    n_pad = pl.cdiv(N, block_n) * block_n

    # Inputs: feature stays in natural layout (no transpose pass, f32 read
    # once); t streamed as a (1, N) int32 row.
    x = feature.reshape(N, D_in).astype(jnp.float32)
    t2 = t.astype(jnp.int32).reshape(1, N)
    if n_pad != N:
        x = jnp.pad(x, ((0, n_pad - N), (0, 0)))
        t2 = jnp.pad(t2, ((0, 0), (0, n_pad - N)))

    fbt = full_basis.T.astype(jnp.float32)        # (T, D_out) tiny, resident
    # Matmul operands in compute dtype (bf16 default), biases stay f32.
    params_in = [p.astype(compute_dtype) if i % 2 == 0 else p.astype(jnp.float32)
                 for i, p in enumerate(params_flat)]

    grid = (n_pad // block_n,)

    in_specs = [
        pl.BlockSpec((block_n, D_in), lambda i: (i, 0)),   # feature tile
        pl.BlockSpec((1, block_n), lambda i: (0, i)),      # t tile
        pl.BlockSpec(fbt.shape, lambda i: (0, 0)),         # full_basis^T
    ]
    for p in params_in:
        in_specs.append(pl.BlockSpec(p.shape, lambda i: (0, 0)))  # replicated

    out_specs = [
        pl.BlockSpec((D_out, block_n), lambda i: (0, i)),  # weights^T
        pl.BlockSpec((1, block_n), lambda i: (0, i)),      # dynamic
    ]
    out_shape = (
        jax.ShapeDtypeStruct((D_out, n_pad), jnp.float32),
        jax.ShapeDtypeStruct((1, n_pad), jnp.float32),
    )

    flops_per_row = sum(2 * p.shape[0] * p.shape[1]
                        for p in params_flat[::2]) + 2 * T * D_out
    bytes_params = sum(int(p.size) * 4 for p in params_flat) + T * D_out * 4
    cost = pl.CostEstimate(
        flops=int(flops_per_row) * int(n_pad),
        transcendentals=0,
        bytes_accessed=int(n_pad) * (D_in + D_out + 2) * 4 + int(bytes_params),
    )

    kernel = _make_decoder_kernel(layers_num)
    wt, dyn = pl.pallas_call(
        kernel,
        out_shape=out_shape,
        grid_spec=pltpu.PrefetchScalarGridSpec(
            num_scalar_prefetch=0,
            grid=grid,
            in_specs=in_specs,
            out_specs=out_specs,
        ),
        compiler_params=pltpu.CompilerParams(
            dimension_semantics=("parallel",)),
        cost_estimate=cost,
    )(x, t2, fbt, *params_in)

    weights = wt[:, :N].T          # (N, D_out) required by module semantics
    static_output = wt[0, :N]      # = weights[:, 0]
    dynamic_output = dyn[0, :N]
    return static_output, dynamic_output, weights


# ----------------------------------------------------------------------------
# Deterministic parameter construction (mirrors nn.Linear init + DCT basis)
# ----------------------------------------------------------------------------
def build_params(key, input_dim, hidden_dim, output_dim, layers_num):
    params = []
    dims_in = [input_dim] + [hidden_dim] * layers_num
    dims_out = [hidden_dim] * layers_num + [output_dim]
    for di, do in zip(dims_in, dims_out):
        key, kw, kb = jax.random.split(key, 3)
        bound = 1.0 / math.sqrt(di)
        W = jax.random.uniform(kw, (do, di), jnp.float32, -bound, bound)
        b = jax.random.uniform(kb, (do, 1), jnp.float32, -bound, bound)
        params.append(W)
        params.append(b)
    return params


def build_full_basis(output_dim, t_num):
    # matrix[n] = (linspace(0, pi, t_num) + 0.5*pi/t_num) * n ; full_basis = cos
    # (row 0 is cos(0) == 1, identical to the module's constant_basis concat)
    tgrid = jnp.linspace(0.0, math.pi, t_num) + 0.5 * math.pi / t_num
    n = jnp.arange(output_dim, dtype=jnp.float32)[:, None]
    return jnp.cos(n * tgrid[None, :]).astype(jnp.float32)  # (D_out, T)


# ----------------------------------------------------------------------------
# Pure-JAX reference (for correctness check)
# ----------------------------------------------------------------------------
def reference_forward(feature, t, params_flat, full_basis, layers_num):
    N = feature.shape[0]
    hp = jax.lax.Precision.HIGHEST
    h = feature.reshape(N, -1)
    for i in range(layers_num):
        W = params_flat[2 * i]        # (out, in)
        b = params_flat[2 * i + 1]    # (out, 1)
        h = jnp.maximum(jnp.dot(h, W.T, precision=hp) + b.T, 0.0)
    Wl = params_flat[2 * layers_num]
    bl = params_flat[2 * layers_num + 1]
    weights = jnp.dot(h, Wl.T, precision=hp) + bl.T
    signals = jnp.dot(weights, full_basis, precision=hp)
    static = weights[:, 0]
    dyn = signals[jnp.arange(N), t]
    return static, dyn, weights


if __name__ == "__main__":
    # configs: feature_dim=32, mlp_level=2, mlp_hidden_dim=32, mlp_basis_num=16
    D_IN, H, D_OUT, L, T_NUM = 32, 32, 16, 2, 24

    params_flat = build_params(jax.random.PRNGKey(42), D_IN, H, D_OUT, L)
    full_basis = build_full_basis(D_OUT, T_NUM)

    key = jax.random.PRNGKey(0)
    for N in (16, 300):   # single-step tile, and multi-step grid with padding
        key, kf, kt = jax.random.split(key, 3)
        feature = jax.random.normal(kf, (N, 1, D_IN), jnp.float32)
        t = jax.random.randint(kt, (N,), 0, T_NUM, jnp.int32)

        ref_s, ref_d, ref_w = reference_forward(feature, t, params_flat,
                                                full_basis, L)

        # f32 path — tight correctness check.
        s32, d32, w32 = decoder_forward(feature, t, params_flat, full_basis,
                                        layers_num=L,
                                        compute_dtype=jnp.float32)
        jax.block_until_ready((s32, d32, w32))
        assert jnp.allclose(s32, ref_s, atol=1e-4, rtol=1e-4)
        assert jnp.allclose(d32, ref_d, atol=1e-4, rtol=1e-4)
        assert jnp.allclose(w32, ref_w, atol=1e-4, rtol=1e-4)

        # bf16 MXU path (default; native on v5e/v6e/v7x) — loose check.
        # Hidden activations are bf16 between layers, so weights/static can
        # deviate ~1e-2 relative from an f32 reference.
        sbf, dbf, wbf = decoder_forward(feature, t, params_flat, full_basis,
                                        layers_num=L)
        jax.block_until_ready((sbf, dbf, wbf))
        assert jnp.allclose(sbf, ref_s, atol=1e-1, rtol=1e-1)
        assert jnp.allclose(dbf, ref_d, atol=1e-1, rtol=1e-1)
        assert jnp.allclose(wbf, ref_w, atol=1e-1, rtol=1e-1)

    print("KERNEL_OK")
</pallas_src>

<mosaic_0001>
module attributes {stable_mosaic.version = 11 : i64} {
  func.func @kernel(%arg0: i32, %arg1: memref<128x32xf32, #tpu.memory_space<vmem>>, %arg2: memref<1x128xi32, #tpu.memory_space<vmem>>, %arg3: memref<24x16xf32, #tpu.memory_space<vmem>>, %arg4: memref<32x32xf32, #tpu.memory_space<vmem>>, %arg5: memref<32x1xf32, #tpu.memory_space<vmem>>, %arg6: memref<32x32xf32, #tpu.memory_space<vmem>>, %arg7: memref<32x1xf32, #tpu.memory_space<vmem>>, %arg8: memref<16x32xf32, #tpu.memory_space<vmem>>, %arg9: memref<16x1xf32, #tpu.memory_space<vmem>>, %arg10: memref<16x128xf32, #tpu.memory_space<vmem>>, %arg11: memref<1x128xf32, #tpu.memory_space<vmem>>) attributes {dimension_semantics = [#tpu.dimension_semantics<parallel>], iteration_bounds = array<i64: 1>, scalar_prefetch = 0 : i64, scratch_operands = 0 : i64, tpu.core_type = #tpu.core_type<tc>, window_params = [{transform_indices = @transform_0, window_bounds = array<i64: 128, 32>}, {transform_indices = @transform_1, window_bounds = array<i64: 1, 128>}, {pipeline_mode = #tpu.pipeline_mode<synchronous>, transform_indices = @transform_2, window_bounds = array<i64: 24, 16>}, {pipeline_mode = #tpu.pipeline_mode<synchronous>, transform_indices = @transform_3, window_bounds = array<i64: 32, 32>}, {pipeline_mode = #tpu.pipeline_mode<synchronous>, transform_indices = @transform_4, window_bounds = array<i64: 32, 1>}, {pipeline_mode = #tpu.pipeline_mode<synchronous>, transform_indices = @transform_5, window_bounds = array<i64: 32, 32>}, {pipeline_mode = #tpu.pipeline_mode<synchronous>, transform_indices = @transform_6, window_bounds = array<i64: 32, 1>}, {pipeline_mode = #tpu.pipeline_mode<synchronous>, transform_indices = @transform_7, window_bounds = array<i64: 16, 32>}, {pipeline_mode = #tpu.pipeline_mode<synchronous>, transform_indices = @transform_8, window_bounds = array<i64: 16, 1>}, {transform_indices = @transform_9, window_bounds = array<i64: 16, 128>}, {transform_indices = @transform_10, window_bounds = array<i64: 1, 128>}]} {
    %c0 = arith.constant 0 : index
    %c0_0 = arith.constant 0 : index
    %0 = vector.load %arg1[%c0, %c0_0] : memref<128x32xf32, #tpu.memory_space<vmem>>, vector<128x32xf32>
    %c0_1 = arith.constant 0 : index
    %c0_2 = arith.constant 0 : index
    %1 = vector.load %arg4[%c0_1, %c0_2] : memref<32x32xf32, #tpu.memory_space<vmem>>, vector<32x32xf32>
    %c0_3 = arith.constant 0 : index
    %c0_4 = arith.constant 0 : index
    %2 = vector.load %arg5[%c0_3, %c0_4] : memref<32x1xf32, #tpu.memory_space<vmem>>, vector<32x1xf32>
    %cst = arith.constant dense<0.000000e+00> : vector<32x128xf32>
    %3 = tpu.matmul %1, %0, %cst {dimension_numbers = #tpu.dot_dimension_numbers<[1], [1], [0], [0], [0, 0, 1, 0], [], []>} : vector<32x32xf32>, vector<128x32xf32>, vector<32x128xf32> -> vector<32x128xf32>
    %4 = vector.broadcast %2 : vector<32x1xf32> to vector<32x128xf32>
    %5 = arith.addf %3, %4 : vector<32x128xf32>
    %cst_5 = arith.constant 0.000000e+00 : f32
    %6 = vector.broadcast %cst_5 : f32 to vector<32x128xf32>
    %7 = arith.maximumf %5, %6 : vector<32x128xf32>
    %c0_6 = arith.constant 0 : index
    %c0_7 = arith.constant 0 : index
    %8 = vector.load %arg6[%c0_6, %c0_7] : memref<32x32xf32, #tpu.memory_space<vmem>>, vector<32x32xf32>
    %c0_8 = arith.constant 0 : index
    %c0_9 = arith.constant 0 : index
    %9 = vector.load %arg7[%c0_8, %c0_9] : memref<32x1xf32, #tpu.memory_space<vmem>>, vector<32x1xf32>
    %cst_10 = arith.constant dense<0.000000e+00> : vector<32x128xf32>
    %10 = tpu.matmul %8, %7, %cst_10 {dimension_numbers = #tpu.dot_dimension_numbers<[1], [0], [0], [1], [0, 0, 1, 1], [], []>} : vector<32x32xf32>, vector<32x128xf32>, vector<32x128xf32> -> vector<32x128xf32>
    %11 = vector.broadcast %9 : vector<32x1xf32> to vector<32x128xf32>
    %12 = arith.addf %10, %11 : vector<32x128xf32>
    %cst_11 = arith.constant 0.000000e+00 : f32
    %13 = vector.broadcast %cst_11 : f32 to vector<32x128xf32>
    %14 = arith.maximumf %12, %13 : vector<32x128xf32>
    %c0_12 = arith.constant 0 : index
    %c0_13 = arith.constant 0 : index
    %15 = vector.load %arg8[%c0_12, %c0_13] : memref<16x32xf32, #tpu.memory_space<vmem>>, vector<16x32xf32>
    %c0_14 = arith.constant 0 : index
    %c0_15 = arith.constant 0 : index
    %16 = vector.load %arg9[%c0_14, %c0_15] : memref<16x1xf32, #tpu.memory_space<vmem>>, vector<16x1xf32>
    %cst_16 = arith.constant dense<0.000000e+00> : vector<16x128xf32>
    %17 = tpu.matmul %15, %14, %cst_16 {dimension_numbers = #tpu.dot_dimension_numbers<[1], [0], [0], [1], [0, 0, 1, 1], [], []>} : vector<16x32xf32>, vector<32x128xf32>, vector<16x128xf32> -> vector<16x128xf32>
    %18 = vector.broadcast %16 : vector<16x1xf32> to vector<16x128xf32>
    %19 = arith.addf %17, %18 : vector<16x128xf32>
    %c0_17 = arith.constant 0 : index
    %c0_18 = arith.constant 0 : index
    %20 = vector.load %arg10[%c0_17, %c0_18] : memref<16x128xf32, #tpu.memory_space<vmem>>, vector<16x128xf32>
    tpu.vector_store %arg10[%c0_17, %c0_18], %19 {strides = array<i32>} : memref<16x128xf32, #tpu.memory_space<vmem>>, vector<16x128xf32>,
    %c0_19 = arith.constant 0 : index
    %c0_20 = arith.constant 0 : index
    %21 = vector.load %arg3[%c0_19, %c0_20] : memref<24x16xf32, #tpu.memory_space<vmem>>, vector<24x16xf32>
    %cst_21 = arith.constant dense<0.000000e+00> : vector<24x128xf32>
    %22 = tpu.matmul %21, %19, %cst_21 {dimension_numbers = #tpu.dot_dimension_numbers<[1], [0], [0], [1], [0, 0, 1, 1], [], []>} : vector<24x16xf32>, vector<16x128xf32>, vector<24x128xf32> -> vector<24x128xf32>
    %c0_22 = arith.constant 0 : index
    %c0_23 = arith.constant 0 : index
    %23 = vector.load %arg2[%c0_22, %c0_23] : memref<1x128xi32, #tpu.memory_space<vmem>>, vector<1x128xi32>
    %c0_i32 = arith.constant 0 : i32
    %c23_i32 = arith.constant 23 : i32
    %24 = vector.broadcast %c0_i32 : i32 to vector<1x128xi32>
    %25 = arith.maxsi %24, %23 : vector<1x128xi32>
    %26 = vector.broadcast %c23_i32 : i32 to vector<1x128xi32>
    %27 = arith.minsi %26, %25 : vector<1x128xi32>
    %28 = tpu.iota {dimensions = array<i32: 0>} : vector<24x128xi32>
    %29 = vector.broadcast %27 : vector<1x128xi32> to vector<24x128xi32>
    %30 = arith.cmpi eq, %28, %29 : vector<24x128xi32>
    %cst_24 = arith.constant 0.000000e+00 : f32
    %31 = vector.broadcast %cst_24 : f32 to vector<24x128xf32>
    %32 = arith.select %30, %22, %31 : vector<24x128xi1>, vector<24x128xf32>
    %cst_25 = arith.constant dense<0.000000e+00> : vector<128xf32>
    %33 = vector.multi_reduction <add>, %32, %cst_25 [0] : vector<24x128xf32> to vector<128xf32>
    %34 = vector.shape_cast %33 : vector<128xf32> to vector<1x128xf32>
    %c0_26 = arith.constant 0 : index
    %c0_27 = arith.constant 0 : index
    %35 = vector.load %arg11[%c0_26, %c0_27] : memref<1x128xf32, #tpu.memory_space<vmem>>, vector<1x128xf32>
    tpu.vector_store %arg11[%c0_26, %c0_27], %34 {strides = array<i32>} : memref<1x128xf32, #tpu.memory_space<vmem>>, vector<1x128xf32>,
    return
  }
  func.func @transform_0(%arg0: i32) -> (i32, i32) {
    %c0_i32 = arith.constant 0 : i32
    %c0_i32_0 = arith.constant 0 : i32
    return %arg0, %c0_i32 : i32, i32
  }
  func.func @transform_1(%arg0: i32) -> (i32, i32) {
    %c0_i32 = arith.constant 0 : i32
    %c0_i32_0 = arith.constant 0 : i32
    return %c0_i32, %arg0 : i32, i32
  }
  func.func @transform_2(%arg0: i32) -> (i32, i32) {
    %c0_i32 = arith.constant 0 : i32
    %c0_i32_0 = arith.constant 0 : i32
    %c0_i32_1 = arith.constant 0 : i32
    return %c0_i32, %c0_i32_0 : i32, i32
  }
  func.func @transform_3(%arg0: i32) -> (i32, i32) {
    %c0_i32 = arith.constant 0 : i32
    %c0_i32_0 = arith.constant 0 : i32
    %c0_i32_1 = arith.constant 0 : i32
    return %c0_i32, %c0_i32_0 : i32, i32
  }
  func.func @transform_4(%arg0: i32) -> (i32, i32) {
    %c0_i32 = arith.constant 0 : i32
    %c0_i32_0 = arith.constant 0 : i32
    %c0_i32_1 = arith.constant 0 : i32
    return %c0_i32, %c0_i32_0 : i32, i32
  }
  func.func @transform_5(%arg0: i32) -> (i32, i32) {
    %c0_i32 = arith.constant 0 : i32
    %c0_i32_0 = arith.constant 0 : i32
    %c0_i32_1 = arith.constant 0 : i32
    return %c0_i32, %c0_i32_0 : i32, i32
  }
  func.func @transform_6(%arg0: i32) -> (i32, i32) {
    %c0_i32 = arith.constant 0 : i32
    %c0_i32_0 = arith.constant 0 : i32
    %c0_i32_1 = arith.constant 0 : i32
    return %c0_i32, %c0_i32_0 : i32, i32
  }
  func.func @transform_7(%arg0: i32) -> (i32, i32) {
    %c0_i32 = arith.constant 0 : i32
    %c0_i32_0 = arith.constant 0 : i32
    %c0_i32_1 = arith.constant 0 : i32
    return %c0_i32, %c0_i32_0 : i32, i32
  }
  func.func @transform_8(%arg0: i32) -> (i32, i32) {
    %c0_i32 = arith.constant 0 : i32
    %c0_i32_0 = arith.constant 0 : i32
    %c0_i32_1 = arith.constant 0 : i32
    return %c0_i32, %c0_i32_0 : i32, i32
  }
  func.func @transform_9(%arg0: i32) -> (i32, i32) {
    %c0_i32 = arith.constant 0 : i32
    %c0_i32_0 = arith.constant 0 : i32
    return %c0_i32, %arg0 : i32, i32
  }
  func.func @transform_10(%arg0: i32) -> (i32, i32) {
    %c0_i32 = arith.constant 0 : i32
    %c0_i32_0 = arith.constant 0 : i32
    return %c0_i32, %arg0 : i32, i32
  }
}

</mosaic_0001>

<llo_original>
// kernel: decoder_forward.1
$region0: #{decoder_forward.1}
  #allocation0 [shape = 'u32[]', space=smem, size = 0x4, offset = 0x4, fixed_abs, tag = 'smem constant byte address 0x4 - core index']
  #allocation1 [shape = 'u32[144,128]{1,0:T(1,128)}', space=vmem, size = 0x12000, scoped, tag = 'internal scratch']
  %s0 = inlined_call_operand.vmem [shape: f32[128,32], index: 0, kind: input, shape index: {}]
  %s1 = inlined_call_operand.vmem [shape: s32[1,128], index: 1, kind: input, shape index: {}]
  %s2 = inlined_call_operand.vmem [shape: f32[24,16], index: 2, kind: input, shape index: {}]
  %s3 = inlined_call_operand.vmem [shape: f32[32,32], index: 3, kind: input, shape index: {}]
  %s4 = inlined_call_operand.vmem [shape: f32[32,1], index: 4, kind: input, shape index: {}]
  %s5 = inlined_call_operand.vmem [shape: f32[32,32], index: 5, kind: input, shape index: {}]
  %s6 = inlined_call_operand.vmem [shape: f32[32,1], index: 6, kind: input, shape index: {}]
  %s7 = inlined_call_operand.vmem [shape: f32[16,32], index: 7, kind: input, shape index: {}]
  %s8 = inlined_call_operand.vmem [shape: f32[16,1], index: 8, kind: input, shape index: {}]
  %s9 = inlined_call_operand.vmem [shape: f32[16,128], index: 9, kind: output, shape index: {0}]
  %s10 = inlined_call_operand.vmem [shape: f32[1,128], index: 10, kind: output, shape index: {1}]
  %11 = xla_tuple %s9, %s10
  %s12 = sld [smem:[#allocation0]]
  $region54: #{decoder_forward.1} parent=0
    _
  %s14 = ssub.s32 1, %s12
  %s15 = scalar_select 0, %s14, %s12
  // Predicated region
  $region2: #{decoder_forward.1} parent=0 // pred_check
    _
  $region3: #{decoder_forward.1} parent=0 // pred_check_branch
    %17 = sbr.rel (0) target = $region5
  $region4: #{decoder_forward.1} parent=0 // pred_region
    _
  $region5: #{decoder_forward.1} parent=0 // pred_fallthru
    _
  // Predicated region
  $region6: #{decoder_forward.1} parent=0 // pred_check
    _
  $region7: #{decoder_forward.1} parent=0 // pred_check_branch
    %19 = sbr.rel (0) target = $region9
  $region8: #{decoder_forward.1} parent=0 // pred_region
    _
  $region9: #{decoder_forward.1} parent=0 // pred_fallthru
    _
  // Predicated region
  $region10: #{decoder_forward.1} parent=0 // pred_check
    _
  $region11: #{decoder_forward.1} parent=0 // pred_check_branch
    %21 = sbr.rel (0) target = $region13
  $region12: #{decoder_forward.1} parent=0 // pred_region
    _
  $region13: #{decoder_forward.1} parent=0 // pred_fallthru
    _
  // Predicated region
  $region14: #{decoder_forward.1} parent=0 // pred_check
    _
  $region15: #{decoder_forward.1} parent=0 // pred_check_branch
    %23 = sbr.rel (0) target = $region17
  $region16: #{decoder_forward.1} parent=0 // pred_region
    _
  $region17: #{decoder_forward.1} parent=0 // pred_fallthru
    _
  // Predicated region
  $region18: #{decoder_forward.1} parent=0 // pred_check
    _
  $region19: #{decoder_forward.1} parent=0 // pred_check_branch
    %25 = sbr.rel (0) target = $region21
  $region20: #{decoder_forward.1} parent=0 // pred_region
    _
  $region21: #{decoder_forward.1} parent=0 // pred_fallthru
    _
  // Predicated region
  $region22: #{decoder_forward.1} parent=0 // pred_check
    _
  $region23: #{decoder_forward.1} parent=0 // pred_check_branch
    %27 = sbr.rel (0) target = $region25
  $region24: #{decoder_forward.1} parent=0 // pred_region
    _
  $region25: #{decoder_forward.1} parent=0 // pred_fallthru
    _
  // Predicated region
  $region26: #{decoder_forward.1} parent=0 // pred_check
    _
  $region27: #{decoder_forward.1} parent=0 // pred_check_branch
    %29 = sbr.rel (0) target = $region29
  $region28: #{decoder_forward.1} parent=0 // pred_region
    _
  $region29: #{decoder_forward.1} parent=0 // pred_fallthru
    _
  // Predicated region
  $region30: #{decoder_forward.1} parent=0 // pred_check
    _
  $region31: #{decoder_forward.1} parent=0 // pred_check_branch
    %31 = sbr.rel (0) target = $region33
  $region32: #{decoder_forward.1} parent=0 // pred_region
    _
  $region33: #{decoder_forward.1} parent=0 // pred_fallthru
    _
  // Predicated region
  $region34: #{decoder_forward.1} parent=0 // pred_check
    _
  $region35: #{decoder_forward.1} parent=0 // pred_check_branch
    %33 = sbr.rel (0) target = $region37
  $region36: #{decoder_forward.1} parent=0 // pred_region
    _
  $region37: #{decoder_forward.1} parent=0 // pred_fallthru
    _
  %v34 = vld [vmem:[%s0] sm:$0xff]
  %v35 = vld [vmem:[%s0 + $0x8] sm:$0xff]
  %v36 = vld [vmem:[%s0 + $0x10] sm:$0xff]
  %v37 = vld [vmem:[%s0 + $0x18] sm:$0xff]
  %v38 = vld [vmem:[%s0 + $0x20] sm:$0xff]
  %v39 = vld [vmem:[%s0 + $0x28] sm:$0xff]
  %v40 = vld [vmem:[%s0 + $0x30] sm:$0xff]
  %v41 = vld [vmem:[%s0 + $0x38] sm:$0xff]
  %v42 = vld [vmem:[%s0 + $0x40] sm:$0xff]
  %v43 = vld [vmem:[%s0 + $0x48] sm:$0xff]
  %v44 = vld [vmem:[%s0 + $0x50] sm:$0xff]
  %v45 = vld [vmem:[%s0 + $0x58] sm:$0xff]
  %v46 = vld [vmem:[%s0 + $0x60] sm:$0xff]
  %v47 = vld [vmem:[%s0 + $0x68] sm:$0xff]
  %v48 = vld [vmem:[%s0 + $0x70] sm:$0xff]
  %v49 = vld [vmem:[%s0 + $0x78] sm:$0xff]
  %v50 = vld [vmem:[%s3] sm:$0xff]
  %v51 = vld [vmem:[%s3 + $0x8] sm:$0xff]
  %v52 = vld [vmem:[%s3 + $0x10] sm:$0xff]
  %v53 = vld [vmem:[%s3 + $0x18] sm:$0xff]
  %v54 = vld [vmem:[%s4] sm:$0xff]
  %v55 = vld [vmem:[%s4 + $0x8] sm:$0xff]
  %v56 = vld [vmem:[%s4 + $0x10] sm:$0xff]
  %v57 = vld [vmem:[%s4 + $0x18] sm:$0xff]
  %59 = vset.pattern.permute.xlu0 0
  %60 = vperm.xlu0 %59, %v54
  %v61 = vpop.permute.xlu0 %60
  %64 = vset.pattern.permute.xlu0 0
  %65 = vperm.xlu0 %64, %v55
  %v66 = vpop.permute.xlu0 %65
  %69 = vset.pattern.permute.xlu0 0
  %70 = vperm.xlu0 %69, %v56
  %v71 = vpop.permute.xlu0 %70
  %74 = vset.pattern.permute.xlu0 0
  %75 = vperm.xlu0 %74, %v57
  %v76 = vpop.permute.xlu0 %75
  %vm78 = vcmask 261120
  %v80 = vsel %vm78, %v50, 0
  %v83 = vsel %vm78, %v51, 0
  %v86 = vsel %vm78, %v52, 0
  %v89 = vsel %vm78, %v53, 0
  %v92 = vsel %vm78, %v34, 0
  %v95 = vsel %vm78, %v35, 0
  %v98 = vsel %vm78, %v36, 0
  %v101 = vsel %vm78, %v37, 0
  %v104 = vsel %vm78, %v38, 0
  %v107 = vsel %vm78, %v39, 0
  %v110 = vsel %vm78, %v40, 0
  %v113 = vsel %vm78, %v41, 0
  %v116 = vsel %vm78, %v42, 0
  %v119 = vsel %vm78, %v43, 0
  %v122 = vsel %vm78, %v44, 0
  %v125 = vsel %vm78, %v45, 0
  %v128 = vsel %vm78, %v46, 0
  %v131 = vsel %vm78, %v47, 0
  %v134 = vsel %vm78, %v48, 0
  %v137 = vsel %vm78, %v49, 0
  %139 = vmatprep.subr.mxu0 0.0
  %140 = vmatpush1.xpose.msra.mxu0 %v92
  %141 = vmatprep.subr.mxu0 0.0
  %142 = vmatpush1.xpose.msra.mxu0 %v95
  %143 = vmatprep.subr.mxu0 0.0
  %144 = vmatpush1.xpose.msra.mxu0 %v98
  %145 = vmatprep.subr.mxu0 0.0
  %146 = vmatpush1.xpose.msra.mxu0 %v101
  %147 = vmatprep.subr.mxu0 0.0
  %148 = vmatpush1.xpose.msra.mxu0 %v104
  %149 = vmatprep.subr.mxu0 0.0
  %150 = vmatpush1.xpose.msra.mxu0 %v107
  %151 = vmatprep.subr.mxu0 0.0
  %152 = vmatpush1.xpose.msra.mxu0 %v110
  %153 = vmatprep.subr.mxu0 0.0
  %154 = vmatpush1.xpose.msra.mxu0 %v113
  %155 = vmatprep.subr.mxu0 0.0
  %156 = vmatpush1.xpose.msra.mxu0 %v116
  %157 = vmatprep.subr.mxu0 0.0
  %158 = vmatpush1.xpose.msra.mxu0 %v119
  %159 = vmatprep.subr.mxu0 0.0
  %160 = vmatpush1.xpose.msra.mxu0 %v122
  %161 = vmatprep.subr.mxu0 0.0
  %162 = vmatpush1.xpose.msra.mxu0 %v125
  %163 = vmatprep.subr.mxu0 0.0
  %164 = vmatpush1.xpose.msra.mxu0 %v128
  %165 = vmatprep.subr.mxu0 0.0
  %166 = vmatpush1.xpose.msra.mxu0 %v131
  %167 = vmatprep.subr.mxu0 0.0
  %168 = vmatpush1.xpose.msra.mxu0 %v134
  %169 = vmatprep.subr.mxu0 0.0
  %170 = vmatpush1.xpose.msra.mxu0 %v137
  %171 = vmatprep.subr.mxu0 0.0
  %172 = vmatpush1.xpose.msra.mxu0 0.0
  %173 = vmatprep.subr.mxu0 0.0
  %174 = vmatpush1.xpose.msra.mxu0 0.0
  %175 = vmatprep.subr.mxu0 0.0
  %176 = vmatpush1.xpose.msra.mxu0 0.0
  %177 = vmatprep.subr.mxu0 0.0
  %178 = vmatpush1.xpose.msra.mxu0 0.0
  %179 = vmatprep.subr.mxu0 0.0
  %180 = vmatpush1.xpose.msra.mxu0 0.0
  %181 = vmatprep.subr.mxu0 0.0
  %182 = vmatpush1.xpose.msra.mxu0 0.0
  %183 = vmatprep.subr.mxu0 0.0
  %184 = vmatpush1.xpose.msra.mxu0 0.0
  %185 = vmatprep.subr.mxu0 0.0
  %186 = vmatpush1.xpose.msra.mxu0 0.0
  %187 = vmatprep.subr.mxu0 0.0
  %188 = vmatpush1.xpose.msra.mxu0 0.0
  %189 = vmatprep.subr.mxu0 0.0
  %190 = vmatpush1.xpose.msra.mxu0 0.0
  %191 = vmatprep.subr.mxu0 0.0
  %192 = vmatpush1.xpose.msra.mxu0 0.0
  %193 = vmatprep.subr.mxu0 0.0
  %194 = vmatpush1.xpose.msra.mxu0 0.0
  %195 = vmatprep.subr.mxu0 0.0
  %196 = vmatpush1.xpose.msra.mxu0 0.0
  %197 = vmatprep.subr.mxu0 0.0
  %198 = vmatpush1.xpose.msra.mxu0 0.0
  %199 = vmatprep.subr.mxu0 0.0
  %200 = vmatpush1.xpose.msra.mxu0 0.0
  %201 = vmatprep.subr.mxu0 0.0
  %202 = vmatpush1.xpose.msra.mxu0 0.0
  %203 = vmatprep.mubr.f32.mxu0 0.0
  %204 = vmatmul.mubr.f32.gmra.mrb[0].mxu0 %v80
  %v205 = vpop.f32.mrb[0].mxu0
  %v206 = vadd.f32 %v61, %v205
  %v207 = vpop.f32.mrb[0].mxu0
  %208 = vmatprep.mubr.f32.mxu0 0.0
  %209 = vmatmul.mubr.f32.gmra.mrb[0].mxu0 %v83
  %v210 = vpop.f32.mrb[0].mxu0
  %v211 = vadd.f32 %v66, %v210
  %v212 = vpop.f32.mrb[0].mxu0
  %213 = vmatprep.mubr.f32.mxu0 0.0
  %214 = vmatmul.mubr.f32.gmra.mrb[0].mxu0 %v86
  %v215 = vpop.f32.mrb[0].mxu0
  %v216 = vadd.f32 %v71, %v215
  %v217 = vpop.f32.mrb[0].mxu0
  %218 = vmatprep.mubr.f32.mxu0 0.0
  %219 = vmatmul.mubr.f32.gmra.mrb[0].mxu0 %v89
  %v220 = vpop.f32.mrb[0].mxu0
  %v221 = vadd.f32 %v76, %v220
  %v222 = vpop.f32.mrb[0].mxu0
  %223 = vdwg.mxu0
  %v224 = vmax.f32 %v206, 0.0
  %v225 = vmax.f32 %v211, 0.0
  %v226 = vmax.f32 %v216, 0.0
  %v227 = vmax.f32 %v221, 0.0
  %v228 = vld [vmem:[%s5] sm:$0xff]
  %v229 = vld [vmem:[%s5 + $0x8] sm:$0xff]
  %v230 = vld [vmem:[%s5 + $0x10] sm:$0xff]
  %v231 = vld [vmem:[%s5 + $0x18] sm:$0xff]
  %v232 = vld [vmem:[%s6] sm:$0xff]
  %v233 = vld [vmem:[%s6 + $0x8] sm:$0xff]
  %v234 = vld [vmem:[%s6 + $0x10] sm:$0xff]
  %v235 = vld [vmem:[%s6 + $0x18] sm:$0xff]
  %237 = vset.pattern.permute.xlu0 0
  %238 = vperm.xlu0 %237, %v232
  %v239 = vpop.permute.xlu0 %238
  %242 = vset.pattern.permute.xlu0 0
  %243 = vperm.xlu0 %242, %v233
  %v244 = vpop.permute.xlu0 %243
  %247 = vset.pattern.permute.xlu0 0
  %248 = vperm.xlu0 %247, %v234
  %v249 = vpop.permute.xlu0 %248
  %252 = vset.pattern.permute.xlu0 0
  %253 = vperm.xlu0 %252, %v235
  %v254 = vpop.permute.xlu0 %253
  %v257 = vsel %vm78, %v228, 0
  %v260 = vsel %vm78, %v229, 0
  %v263 = vsel %vm78, %v230, 0
  %v266 = vsel %vm78, %v231, 0
  %268 = vmatprep.subr.mxu0 0.0
  %269 = vmatpush1.msra.mxu0 %v224
  %270 = vmatprep.subr.mxu0 0.0
  %271 = vmatpush1.msra.mxu0 %v225
  %272 = vmatprep.subr.mxu0 0.0
  %273 = vmatpush1.msra.mxu0 %v226
  %274 = vmatprep.subr.mxu0 0.0
  %275 = vmatpush1.msra.mxu0 %v227
  %276 = vmatprep.subr.mxu0 0.0
  %277 = vmatpush1.msra.mxu0 0.0
  %278 = vmatprep.subr.mxu0 0.0
  %279 = vmatpush1.msra.mxu0 0.0
  %280 = vmatprep.subr.mxu0 0.0
  %281 = vmatpush1.msra.mxu0 0.0
  %282 = vmatprep.subr.mxu0 0.0
  %283 = vmatpush1.msra.mxu0 0.0
  %284 = vmatprep.subr.mxu0 0.0
  %285 = vmatpush1.msra.mxu0 0.0
  %286 = vmatprep.subr.mxu0 0.0
  %287 = vmatpush1.msra.mxu0 0.0
  %288 = vmatprep.subr.mxu0 0.0
  %289 = vmatpush1.msra.mxu0 0.0
  %290 = vmatprep.subr.mxu0 0.0
  %291 = vmatpush1.msra.mxu0 0.0
  %292 = vmatprep.subr.mxu0 0.0
  %293 = vmatpush1.msra.mxu0 0.0
  %294 = vmatprep.subr.mxu0 0.0
  %295 = vmatpush1.msra.mxu0 0.0
  %296 = vmatprep.subr.mxu0 0.0
  %297 = vmatpush1.msra.mxu0 0.0
  %298 = vmatprep.subr.mxu0 0.0
  %299 = vmatpush1.msra.mxu0 0.0
  %300 = vmatprep.subr.mxu0 0.0
  %301 = vmatpush1.msra.mxu0 0.0
  %302 = vmatprep.subr.mxu0 0.0
  %303 = vmatpush1.msra.mxu0 0.0
  %304 = vmatprep.subr.mxu0 0.0
  %305 = vmatpush1.msra.mxu0 0.0
  %306 = vmatprep.subr.mxu0 0.0
  %307 = vmatpush1.msra.mxu0 0.0
  %308 = vmatprep.subr.mxu0 0.0
  %309 = vmatpush1.msra.mxu0 0.0
  %310 = vmatprep.subr.mxu0 0.0
  %311 = vmatpush1.msra.mxu0 0.0
  %312 = vmatprep.subr.mxu0 0.0
  %313 = vmatpush1.msra.mxu0 0.0
  %314 = vmatprep.subr.mxu0 0.0
  %315 = vmatpush1.msra.mxu0 0.0
  %316 = vmatprep.subr.mxu0 0.0
  %317 = vmatpush1.msra.mxu0 0.0
  %318 = vmatprep.subr.mxu0 0.0
  %319 = vmatpush1.msra.mxu0 0.0
  %320 = vmatprep.subr.mxu0 0.0
  %321 = vmatpush1.msra.mxu0 0.0
  %322 = vmatprep.subr.mxu0 0.0
  %323 = vmatpush1.msra.mxu0 0.0
  %324 = vmatprep.subr.mxu0 0.0
  %325 = vmatpush1.msra.mxu0 0.0
  %326 = vmatprep.subr.mxu0 0.0
  %327 = vmatpush1.msra.mxu0 0.0
  %328 = vmatprep.subr.mxu0 0.0
  %329 = vmatpush1.msra.mxu0 0.0
  %330 = vmatprep.subr.mxu0 0.0
  %331 = vmatpush1.msra.mxu0 0.0
  %332 = vmatprep.mubr.f32.mxu0 0.0
  %333 = vmatmul.mubr.f32.gmra.mrb[0].mxu0 %v257
  %v334 = vpop.f32.mrb[0].mxu0
  %v335 = vadd.f32 %v239, %v334
  %v336 = vpop.f32.mrb[0].mxu0
  %337 = vmatprep.mubr.f32.mxu0 0.0
  %338 = vmatmul.mubr.f32.gmra.mrb[0].mxu0 %v260
  %v339 = vpop.f32.mrb[0].mxu0
  %v340 = vadd.f32 %v244, %v339
  %v341 = vpop.f32.mrb[0].mxu0
  %342 = vmatprep.mubr.f32.mxu0 0.0
  %343 = vmatmul.mubr.f32.gmra.mrb[0].mxu0 %v263
  %v344 = vpop.f32.mrb[0].mxu0
  %v345 = vadd.f32 %v249, %v344
  %v346 = vpop.f32.mrb[0].mxu0
  %347 = vmatprep.mubr.f32.mxu0 0.0
  %348 = vmatmul.mubr.f32.gmra.mrb[0].mxu0 %v266
  %v349 = vpop.f32.mrb[0].mxu0
  %v350 = vadd.f32 %v254, %v349
  %v351 = vpop.f32.mrb[0].mxu0
  %352 = vdwg.mxu0
  %v353 = vmax.f32 %v335, 0.0
  %v354 = vmax.f32 %v340, 0.0
  %v355 = vmax.f32 %v345, 0.0
  %v356 = vmax.f32 %v350, 0.0
  %v357 = vld [vmem:[%s7] sm:$0xff]
  %v358 = vld [vmem:[%s7 + $0x8] sm:$0xff]
  %v359 = vld [vmem:[%s8] sm:$0xff]
  %v360 = vld [vmem:[%s8 + $0x8] sm:$0xff]
  %362 = vset.pattern.permute.xlu0 0
  %363 = vperm.xlu0 %362, %v359
  %v364 = vpop.permute.xlu0 %363
  %367 = vset.pattern.permute.xlu0 0
  %368 = vperm.xlu0 %367, %v360
  %v369 = vpop.permute.xlu0 %368
  %v372 = vsel %vm78, %v357, 0
  %v375 = vsel %vm78, %v358, 0
  %377 = vmatprep.subr.mxu0 0.0
  %378 = vmatpush1.msra.mxu0 %v353
  %379 = vmatprep.subr.mxu0 0.0
  %380 = vmatpush1.msra.mxu0 %v354
  %381 = vmatprep.subr.mxu0 0.0
  %382 = vmatpush1.msra.mxu0 %v355
  %383 = vmatprep.subr.mxu0 0.0
  %384 = vmatpush1.msra.mxu0 %v356
  %385 = vmatprep.subr.mxu0 0.0
  %386 = vmatpush1.msra.mxu0 0.0
  %387 = vmatprep.subr.mxu0 0.0
  %388 = vmatpush1.msra.mxu0 0.0
  %389 = vmatprep.subr.mxu0 0.0
  %390 = vmatpush1.msra.mxu0 0.0
  %391 = vmatprep.subr.mxu0 0.0
  %392 = vmatpush1.msra.mxu0 0.0
  %393 = vmatprep.subr.mxu0 0.0
  %394 = vmatpush1.msra.mxu0 0.0
  %395 = vmatprep.subr.mxu0 0.0
  %396 = vmatpush1.msra.mxu0 0.0
  %397 = vmatprep.subr.mxu0 0.0
  %398 = vmatpush1.msra.mxu0 0.0
  %399 = vmatprep.subr.mxu0 0.0
  %400 = vmatpush1.msra.mxu0 0.0
  %401 = vmatprep.subr.mxu0 0.0
  %402 = vmatpush1.msra.mxu0 0.0
  %403 = vmatprep.subr.mxu0 0.0
  %404 = vmatpush1.msra.mxu0 0.0
  %405 = vmatprep.subr.mxu0 0.0
  %406 = vmatpush1.msra.mxu0 0.0
  %407 = vmatprep.subr.mxu0 0.0
  %408 = vmatpush1.msra.mxu0 0.0
  %409 = vmatprep.subr.mxu0 0.0
  %410 = vmatpush1.msra.mxu0 0.0
  %411 = vmatprep.subr.mxu0 0.0
  %412 = vmatpush1.msra.mxu0 0.0
  %413 = vmatprep.subr.mxu0 0.0
  %414 = vmatpush1.msra.mxu0 0.0
  %415 = vmatprep.subr.mxu0 0.0
  %416 = vmatpush1.msra.mxu0 0.0
  %417 = vmatprep.subr.mxu0 0.0
  %418 = vmatpush1.msra.mxu0 0.0
  %419 = vmatprep.subr.mxu0 0.0
  %420 = vmatpush1.msra.mxu0 0.0
  %421 = vmatprep.subr.mxu0 0.0
  %422 = vmatpush1.msra.mxu0 0.0
  %423 = vmatprep.subr.mxu0 0.0
  %424 = vmatpush1.msra.mxu0 0.0
  %425 = vmatprep.subr.mxu0 0.0
  %426 = vmatpush1.msra.mxu0 0.0
  %427 = vmatprep.subr.mxu0 0.0
  %428 = vmatpush1.msra.mxu0 0.0
  %429 = vmatprep.subr.mxu0 0.0
  %430 = vmatpush1.msra.mxu0 0.0
  %431 = vmatprep.subr.mxu0 0.0
  %432 = vmatpush1.msra.mxu0 0.0
  %433 = vmatprep.subr.mxu0 0.0
  %434 = vmatpush1.msra.mxu0 0.0
  %435 = vmatprep.subr.mxu0 0.0
  %436 = vmatpush1.msra.mxu0 0.0
  %437 = vmatprep.subr.mxu0 0.0
  %438 = vmatpush1.msra.mxu0 0.0
  %439 = vmatprep.subr.mxu0 0.0
  %440 = vmatpush1.msra.mxu0 0.0
  %441 = vmatprep.mubr.f32.mxu0 0.0
  %442 = vmatmul.mubr.f32.gmra.mrb[0].mxu0 %v372
  %v443 = vpop.f32.mrb[0].mxu0
  %v444 = vadd.f32 %v364, %v443
  %v445 = vpop.f32.mrb[0].mxu0
  %446 = vmatprep.mubr.f32.mxu0 0.0
  %447 = vmatmul.mubr.f32.gmra.mrb[0].mxu0 %v375
  %v448 = vpop.f32.mrb[0].mxu0
  %v449 = vadd.f32 %v369, %v448
  %v450 = vpop.f32.mrb[0].mxu0
  %451 = vdwg.mxu0
  %452 = vst [vmem:[%s9] sm:$0xff] %v444
  %453 = vst [vmem:[%s9 + $0x8] sm:$0xff] %v449
  %v454 = vld [vmem:[%s2] sm:$0xff]
  %v455 = vld [vmem:[%s2 + $0x8] sm:$0xff]
  %v456 = vld [vmem:[%s2 + $0x10] sm:$0xff]
  %vm457 = vcmask 130048
  %v459 = vsel %vm457, %v454, 0
  %v462 = vsel %vm457, %v455, 0
  %v465 = vsel %vm457, %v456, 0
  %467 = vmatprep.subr.mxu0 0.0
  %468 = vmatpush1.msra.mxu0 %v444
  %469 = vmatprep.subr.mxu0 0.0
  %470 = vmatpush1.msra.mxu0 %v449
  %471 = vmatprep.subr.mxu0 0.0
  %472 = vmatpush1.msra.mxu0 0.0
  %473 = vmatprep.subr.mxu0 0.0
  %474 = vmatpush1.msra.mxu0 0.0
  %475 = vmatprep.subr.mxu0 0.0
  %476 = vmatpush1.msra.mxu0 0.0
  %477 = vmatprep.subr.mxu0 0.0
  %478 = vmatpush1.msra.mxu0 0.0
  %479 = vmatprep.subr.mxu0 0.0
  %480 = vmatpush1.msra.mxu0 0.0
  %481 = vmatprep.subr.mxu0 0.0
  %482 = vmatpush1.msra.mxu0 0.0
  %483 = vmatprep.subr.mxu0 0.0
  %484 = vmatpush1.msra.mxu0 0.0
  %485 = vmatprep.subr.mxu0 0.0
  %486 = vmatpush1.msra.mxu0 0.0
  %487 = vmatprep.subr.mxu0 0.0
  %488 = vmatpush1.msra.mxu0 0.0
  %489 = vmatprep.subr.mxu0 0.0
  %490 = vmatpush1.msra.mxu0 0.0
  %491 = vmatprep.subr.mxu0 0.0
  %492 = vmatpush1.msra.mxu0 0.0
  %493 = vmatprep.subr.mxu0 0.0
  %494 = vmatpush1.msra.mxu0 0.0
  %495 = vmatprep.subr.mxu0 0.0
  %496 = vmatpush1.msra.mxu0 0.0
  %497 = vmatprep.subr.mxu0 0.0
  %498 = vmatpush1.msra.mxu0 0.0
  %499 = vmatprep.subr.mxu0 0.0
  %500 = vmatpush1.msra.mxu0 0.0
  %501 = vmatprep.subr.mxu0 0.0
  %502 = vmatpush1.msra.mxu0 0.0
  %503 = vmatprep.subr.mxu0 0.0
  %504 = vmatpush1.msra.mxu0 0.0
  %505 = vmatprep.subr.mxu0 0.0
  %506 = vmatpush1.msra.mxu0 0.0
  %507 = vmatprep.subr.mxu0 0.0
  %508 = vmatpush1.msra.mxu0 0.0
  %509 = vmatprep.subr.mxu0 0.0
  %510 = vmatpush1.msra.mxu0 0.0
  %511 = vmatprep.subr.mxu0 0.0
  %512 = vmatpush1.msra.mxu0 0.0
  %513 = vmatprep.subr.mxu0 0.0
  %514 = vmatpush1.msra.mxu0 0.0
  %515 = vmatprep.subr.mxu0 0.0
  %516 = vmatpush1.msra.mxu0 0.0
  %517 = vmatprep.subr.mxu0 0.0
  %518 = vmatpush1.msra.mxu0 0.0
  %519 = vmatprep.subr.mxu0 0.0
  %520 = vmatpush1.msra.mxu0 0.0
  %521 = vmatprep.subr.mxu0 0.0
  %522 = vmatpush1.msra.mxu0 0.0
  %523 = vmatprep.subr.mxu0 0.0
  %524 = vmatpush1.msra.mxu0 0.0
  %525 = vmatprep.subr.mxu0 0.0
  %526 = vmatpush1.msra.mxu0 0.0
  %527 = vmatprep.subr.mxu0 0.0
  %528 = vmatpush1.msra.mxu0 0.0
  %529 = vmatprep.subr.mxu0 0.0
  %530 = vmatpush1.msra.mxu0 0.0
  %531 = vmatprep.mubr.f32.mxu0 0.0
  %532 = vmatmul.mubr.f32.gmra.mrb[0].mxu0 %v459
  %v533 = vpop.f32.mrb[0].mxu0
  %v534 = vadd.f32 0.0, %v533
  %v535 = vpop.f32.mrb[0].mxu0
  %536 = vmatprep.mubr.f32.mxu0 0.0
  %537 = vmatmul.mubr.f32.gmra.mrb[0].mxu0 %v462
  %v538 = vpop.f32.mrb[0].mxu0
  %v539 = vadd.f32 0.0, %v538
  %v540 = vpop.f32.mrb[0].mxu0
  %541 = vmatprep.mubr.f32.mxu0 0.0
  %542 = vmatmul.mubr.f32.gmra.mrb[0].mxu0 %v465
  %v543 = vpop.f32.mrb[0].mxu0
  %v544 = vadd.f32 0.0, %v543
  %v545 = vpop.f32.mrb[0].mxu0
  %546 = vdwg.mxu0
  %v547 = vld [vmem:[%s1] sm:$0x1]
  %vm548 = vcmp.gt.s32.totalorder %v547, 0
  %v549 = vsel %vm548, %v547, 0
  %vm550 = vcmp.lt.s32.totalorder %v549, 23
  %v551 = vsel %vm550, %v549, 23
  %v552 = vlaneseq
  %v553 = vshrl.u32 %v552, 7
  %v554 = vadd.s32 %v553, 8
  %v555 = vadd.s32 %v553, 16
  %v556 = vlaneseq
  %v557 = vshrl.u32 %v556, 7
  %v558 = vsub.s32 0, %v557
  %v559 = vrot.slane %v551, %v558
  %vm560 = vcmp.eq.s32.totalorder %v553, %v559
  %vm561 = vcmp.eq.s32.totalorder %v554, %v559
  %vm562 = vcmp.eq.s32.totalorder %v555, %v559
  %v563 = vsel %vm560, %v534, 0.0
  %v564 = vsel %vm561, %v539, 0.0
  %v565 = vsel %vm562, %v544, 0.0
  %v566 = vadd.f32 %v563, %v564
  %v567 = vadd.f32 %v566, %v565
  %v568 = vrot.slane %v567, 4
  %v569 = vadd.f32 %v567, %v568
  %v570 = vrot.slane %v569, 2
  %v571 = vadd.f32 %v569, %v570
  %v572 = vrot.slane %v571, 1
  %v573 = vadd.f32 %v571, %v572
  %574 = vst [vmem:[%s10] sm:$0x1] %v573
  // Predicated region
  $region38: #{decoder_forward.1} parent=0 // pred_check
    _
  $region39: #{decoder_forward.1} parent=0 // pred_check_branch
    %576 = sbr.rel (0) target = $region41
  $region40: #{decoder_forward.1} parent=0 // pred_region
    _
  $region41: #{decoder_forward.1} parent=0 // pred_fallthru
    _
  // Predicated region
  $region42: #{decoder_forward.1} parent=0 // pred_check
    _
  $region43: #{decoder_forward.1} parent=0 // pred_check_branch
    %578 = sbr.rel (0) target = $region45
  $region44: #{decoder_forward.1} parent=0 // pred_region
    _
  $region45: #{decoder_forward.1} parent=0 // pred_fallthru
    _
  // Predicated region
  $region46: #{decoder_forward.1} parent=0 // pred_check
    _
  $region47: #{decoder_forward.1} parent=0 // pred_check_branch
    %580 = sbr.rel (0) target = $region49
  $region48: #{decoder_forward.1} parent=0 // pred_region
    _
  $region49: #{decoder_forward.1} parent=0 // pred_fallthru
    _
  // Predicated region
  $region50: #{decoder_forward.1} parent=0 // pred_check
    _
  $region51: #{decoder_forward.1} parent=0 // pred_check_branch
    %582 = sbr.rel (0) target = $region53
  $region52: #{decoder_forward.1} parent=0 // pred_region
    _
  $region53: #{decoder_forward.1} parent=0 // pred_fallthru
    _

</llo_original>
